<compile_context>
chip_gen: v5e
topology: v5e:2x2
jax: 0.10.0
libtpu: 0.0.40
codegen_flags: <defaults>
</compile_context>

<pallas_src>
import jax
import jax.numpy as jnp
from jax import lax
from jax.experimental import pallas as pl
from jax.experimental.pallas import tpu as pltpu

BN_EPS = 1e-5

# Layer widths: conv1..conv4 then fc1.
C1, C2, C3, C4, C_OUT = 14, 20, 25, 40, 5

# Weight slab: 8-aligned sublane offsets for w1, w2, w3, w4, wf.
_W_OFF = (0, 16, 40, 72, 112)
_W_ROWS = 120
_W_COLS = 40          # max Cin (fc1 has Cin = 40)

# Param slab column layout (rows 0:Cout of each column are valid).
_COL_B = (0, 1, 2, 3)       # conv biases b1..b4
_COL_BF = 4                 # fc bias
_COL_G = (5, 6, 7, 8)       # BN gammas g1..g4
_COL_BE = (9, 10, 11, 12)   # BN betas  be1..be4
_P_ROWS = 40
_P_COLS = 13


def _make_kernel(c_in, b_actual, b_pad):
    """Build the kernel with static shapes closed over (no dynamic control)."""
    layer_dims = ((c_in, C1), (C1, C2), (C2, C3), (C3, C4))
    inv_b = 1.0 / float(b_actual)

    def kernel(x_ref, wslab_ref, pslab_ref, out_ref):
        p = pslab_ref[...]                                   # (40, 13) packed params

        # Lane mask over the padded batch columns (batch lives on lanes).
        lane = lax.broadcasted_iota(jnp.int32, (1, b_pad), 1)
        mask = (lane < b_actual).astype(jnp.float32)         # (1, B_pad)

        h = x_ref[...]                                       # (C_in, B_pad)
        for i, (cin, cout) in enumerate(layer_dims):
            # Pre-laid-out weight slice: no in-kernel transpose.
            w = wslab_ref[_W_OFF[i]:_W_OFF[i] + cout, 0:cin]     # (Cout, Cin)
            b = p[0:cout, _COL_B[i]:_COL_B[i] + 1]               # (Cout, 1)
            g = p[0:cout, _COL_G[i]:_COL_G[i] + 1]
            be = p[0:cout, _COL_BE[i]:_COL_BE[i] + 1]

            # 1x1 conv == matmul on the MXU; batch stays on the lane axis.
            y = jnp.dot(w, h, preferred_element_type=jnp.float32) + b

            # Training-mode BatchNorm over the (masked) batch/lane axis,
            # biased variance, then gamma/beta.
            mean = jnp.sum(y * mask, axis=1, keepdims=True) * inv_b
            d = y - mean
            var = jnp.sum(d * d * mask, axis=1, keepdims=True) * inv_b
            y = d * lax.rsqrt(var + BN_EPS) * g + be

            # Swish(y, 1.0)
            h = y * jax.nn.sigmoid(y)

        # flatten + fc1: (5, 40) @ (40, B_pad) + bias -> lane-dense output.
        wf = wslab_ref[_W_OFF[4]:_W_OFF[4] + C_OUT, 0:C4]
        bf = p[0:C_OUT, _COL_BF:_COL_BF + 1]
        out_ref[...] = jnp.dot(wf, h, preferred_element_type=jnp.float32) + bf

    return kernel


def pack_params(params, c_in):
    """Pack the 18 small tensors into two slabs (2 DMAs instead of 18)."""
    wslab = jnp.zeros((_W_ROWS, _W_COLS), jnp.float32)
    dims = ((c_in, C1), (C1, C2), (C2, C3), (C3, C4), (C4, C_OUT))
    names = ("w1", "w2", "w3", "w4", "wf")
    for off, name, (cin, cout) in zip(_W_OFF, names, dims):
        wslab = wslab.at[off:off + cout, 0:cin].set(params[name].astype(jnp.float32))

    pslab = jnp.zeros((_P_ROWS, _P_COLS), jnp.float32)
    for i, cout in enumerate((C1, C2, C3, C4)):
        pslab = pslab.at[0:cout, _COL_B[i]].set(params[f"b{i + 1}"].astype(jnp.float32))
        pslab = pslab.at[0:cout, _COL_G[i]].set(params[f"g{i + 1}"].astype(jnp.float32))
        pslab = pslab.at[0:cout, _COL_BE[i]].set(params[f"be{i + 1}"].astype(jnp.float32))
    pslab = pslab.at[0:C_OUT, _COL_BF].set(params["bf"].astype(jnp.float32))
    return wslab, pslab


def betelnet_forward(x_nchw, params):
    B, C, H, W = x_nchw.shape
    assert H == 1 and W == 1, "BetelNet's fc1(40, 5) requires H = W = 1"
    b_pad = ((B + 127) // 128) * 128

    # Transpose so batch sits on lanes, channels on sublanes; zero-pad lanes.
    x_t = jnp.transpose(x_nchw.reshape(B, C).astype(jnp.float32))   # (C, B)
    x_t = jnp.pad(x_t, ((0, 0), (0, b_pad - B)))                    # (C, B_pad)

    wslab, pslab = pack_params(params, C)

    flops = 2 * B * (C * C1 + C1 * C2 + C2 * C3 + C3 * C4 + C4 * C_OUT)
    transcendentals = B * (C1 + C2 + C3 + C4)
    bytes_accessed = int(4 * (x_t.size + C_OUT * b_pad + wslab.size + pslab.size))

    # Rough resident f32 working-set estimate (padded sublanes) + slabs + slack.
    est = 4 * b_pad * (8 + 16 + 24 + 32 + 40 + 8) + 256 * 1024
    vmem_limit = int(min(48 * 2**20, max(4 * 2**20, 2 * est)))

    vmem = pl.BlockSpec(memory_space=pltpu.MemorySpace.VMEM)
    out_full = pl.pallas_call(
        _make_kernel(C, B, b_pad),
        out_shape=jax.ShapeDtypeStruct((C_OUT, b_pad), jnp.float32),
        in_specs=[vmem, vmem, vmem],
        out_specs=vmem,
        compiler_params=pltpu.CompilerParams(vmem_limit_bytes=vmem_limit),
        cost_estimate=pl.CostEstimate(
            flops=flops,
            transcendentals=transcendentals,
            bytes_accessed=bytes_accessed,
        ),
    )(x_t, wslab, pslab)

    # Drop lane padding and return the PyTorch-layout (B, 5) result.
    return out_full[:, :B].T


def betelnet_reference(x_nchw, params):
    """Pure-JAX reference (PyTorch semantics) for correctness checking."""
    B, C, H, W = x_nchw.shape
    h = x_nchw.reshape(B, C).astype(jnp.float32)
    for i in (1, 2, 3, 4):
        y = h @ params[f"w{i}"].T + params[f"b{i}"][None, :]
        mean = jnp.mean(y, axis=0, keepdims=True)
        var = jnp.mean((y - mean) ** 2, axis=0, keepdims=True)
        y = (y - mean) / jnp.sqrt(var + BN_EPS) * params[f"g{i}"][None, :] \
            + params[f"be{i}"][None, :]
        h = y * jax.nn.sigmoid(y)
    return h @ params["wf"].T + params["bf"][None, :]


def init_params(key, in_channels):
    """Deterministic synthetic weights matching BetelNet's shapes."""
    dims = [(C1, in_channels), (C2, C1), (C3, C2), (C4, C3)]
    params = {}
    for i, (co, ci) in enumerate(dims, start=1):
        key, k1, k2 = jax.random.split(key, 3)
        scale = 1.0 / jnp.sqrt(jnp.float32(ci))
        # conv weight (co, ci, 1, 1) stored as (co, ci)
        params[f"w{i}"] = jax.random.uniform(k1, (co, ci), jnp.float32, -scale, scale)
        params[f"b{i}"] = jax.random.uniform(k2, (co,), jnp.float32, -scale, scale)
        params[f"g{i}"] = jnp.ones((co,), jnp.float32)    # BN gamma
        params[f"be{i}"] = jnp.zeros((co,), jnp.float32)  # BN beta
    key, k1, k2 = jax.random.split(key, 3)
    scale = 1.0 / jnp.sqrt(jnp.float32(C4))
    params["wf"] = jax.random.uniform(k1, (C_OUT, C4), jnp.float32, -scale, scale)
    params["bf"] = jax.random.uniform(k2, (C_OUT,), jnp.float32, -scale, scale)
    return params


if __name__ == "__main__":
    key = jax.random.PRNGKey(0)
    kx, kp = jax.random.split(key)

    B, C_in = 2, 4
    x = jax.random.normal(kx, (B, C_in, 1, 1), jnp.float32)  # NCHW, H=W=1
    params = init_params(kp, C_in)

    out = betelnet_forward(x, params)
    out = jax.block_until_ready(out)

    ref = betelnet_reference(x, params)
    assert out.shape == (B, C_OUT)
    assert jnp.allclose(out, ref, atol=1e-4, rtol=1e-4), "mismatch vs reference"

    print("KERNEL_OK")
</pallas_src>

<mosaic_0001>
module attributes {stable_mosaic.version = 11 : i64} {
  func.func @kernel(%arg0: memref<4x128xf32, #tpu.memory_space<vmem>>, %arg1: memref<120x40xf32, #tpu.memory_space<vmem>>, %arg2: memref<40x13xf32, #tpu.memory_space<vmem>>, %arg3: memref<5x128xf32, #tpu.memory_space<vmem>>) attributes {dimension_semantics = [], scalar_prefetch = 0 : i64, scratch_operands = 0 : i64, tpu.core_type = #tpu.core_type<tc>} {
    %c0 = arith.constant 0 : index
    %c0_0 = arith.constant 0 : index
    %0 = vector.load %arg2[%c0, %c0_0] : memref<40x13xf32, #tpu.memory_space<vmem>>, vector<40x13xf32>
    %1 = tpu.iota {dimensions = array<i32: 1>} : vector<1x128xi32>
    %c2_i32 = arith.constant 2 : i32
    %2 = vector.broadcast %c2_i32 : i32 to vector<1x128xi32>
    %3 = arith.cmpi slt, %1, %2 : vector<1x128xi32>
    %4 = arith.extui %3 : vector<1x128xi1> to vector<1x128xi32>
    %5 = arith.sitofp %4 : vector<1x128xi32> to vector<1x128xf32>
    %c0_1 = arith.constant 0 : index
    %c0_2 = arith.constant 0 : index
    %6 = vector.load %arg0[%c0_1, %c0_2] : memref<4x128xf32, #tpu.memory_space<vmem>>, vector<4x128xf32>
    %c0_3 = arith.constant 0 : index
    %c0_4 = arith.constant 0 : index
    %7 = vector.load %arg1[%c0_3, %c0_4] : memref<120x40xf32, #tpu.memory_space<vmem>>, vector<14x4xf32>
    %8 = vector.extract_strided_slice %0 {offsets = [0, 0], sizes = [14, 1], strides = [1, 1]} : vector<40x13xf32> to vector<14x1xf32>
    %9 = vector.extract_strided_slice %0 {offsets = [0, 5], sizes = [14, 1], strides = [1, 1]} : vector<40x13xf32> to vector<14x1xf32>
    %10 = vector.extract_strided_slice %0 {offsets = [0, 9], sizes = [14, 1], strides = [1, 1]} : vector<40x13xf32> to vector<14x1xf32>
    %cst = arith.constant dense<0.000000e+00> : vector<14x128xf32>
    %11 = tpu.matmul %7, %6, %cst {dimension_numbers = #tpu.dot_dimension_numbers<[1], [0], [0], [1], [0, 0, 1, 1], [], []>} : vector<14x4xf32>, vector<4x128xf32>, vector<14x128xf32> -> vector<14x128xf32>
    %12 = vector.broadcast %8 : vector<14x1xf32> to vector<14x128xf32>
    %13 = arith.addf %11, %12 : vector<14x128xf32>
    %14 = vector.broadcast %5 : vector<1x128xf32> to vector<14x128xf32>
    %15 = arith.mulf %13, %14 : vector<14x128xf32>
    %cst_5 = arith.constant dense<0.000000e+00> : vector<14xf32>
    %16 = vector.multi_reduction <add>, %15, %cst_5 [1] : vector<14x128xf32> to vector<14xf32>
    %17 = vector.shape_cast %16 : vector<14xf32> to vector<14x1xf32>
    %cst_6 = arith.constant 5.000000e-01 : f32
    %18 = vector.broadcast %cst_6 : f32 to vector<14x1xf32>
    %19 = arith.mulf %17, %18 : vector<14x1xf32>
    %20 = vector.broadcast %19 : vector<14x1xf32> to vector<14x128xf32>
    %21 = arith.subf %13, %20 : vector<14x128xf32>
    %22 = arith.mulf %21, %21 : vector<14x128xf32>
    %23 = vector.broadcast %5 : vector<1x128xf32> to vector<14x128xf32>
    %24 = arith.mulf %22, %23 : vector<14x128xf32>
    %cst_7 = arith.constant dense<0.000000e+00> : vector<14xf32>
    %25 = vector.multi_reduction <add>, %24, %cst_7 [1] : vector<14x128xf32> to vector<14xf32>
    %26 = vector.shape_cast %25 : vector<14xf32> to vector<14x1xf32>
    %cst_8 = arith.constant 5.000000e-01 : f32
    %27 = vector.broadcast %cst_8 : f32 to vector<14x1xf32>
    %28 = arith.mulf %26, %27 : vector<14x1xf32>
    %cst_9 = arith.constant 9.99999974E-6 : f32
    %29 = vector.broadcast %cst_9 : f32 to vector<14x1xf32>
    %30 = arith.addf %28, %29 : vector<14x1xf32>
    %31 = math.rsqrt %30 : vector<14x1xf32>
    %32 = vector.broadcast %31 : vector<14x1xf32> to vector<14x128xf32>
    %33 = arith.mulf %21, %32 : vector<14x128xf32>
    %34 = vector.broadcast %9 : vector<14x1xf32> to vector<14x128xf32>
    %35 = arith.mulf %33, %34 : vector<14x128xf32>
    %36 = vector.broadcast %10 : vector<14x1xf32> to vector<14x128xf32>
    %37 = arith.addf %35, %36 : vector<14x128xf32>
    %38 = arith.negf %37 : vector<14x128xf32>
    %39 = math.exp %38 : vector<14x128xf32>
    %cst_10 = arith.constant 1.000000e+00 : f32
    %40 = vector.broadcast %cst_10 : f32 to vector<14x128xf32>
    %41 = arith.addf %40, %39 : vector<14x128xf32>
    %42 = arith.divf %40, %41 : vector<14x128xf32>
    %43 = arith.mulf %37, %42 : vector<14x128xf32>
    %c16 = arith.constant 16 : index
    %c0_11 = arith.constant 0 : index
    %44 = vector.load %arg1[%c16, %c0_11] : memref<120x40xf32, #tpu.memory_space<vmem>>, vector<20x14xf32>
    %45 = vector.extract_strided_slice %0 {offsets = [0, 1], sizes = [20, 1], strides = [1, 1]} : vector<40x13xf32> to vector<20x1xf32>
    %46 = vector.extract_strided_slice %0 {offsets = [0, 6], sizes = [20, 1], strides = [1, 1]} : vector<40x13xf32> to vector<20x1xf32>
    %47 = vector.extract_strided_slice %0 {offsets = [0, 10], sizes = [20, 1], strides = [1, 1]} : vector<40x13xf32> to vector<20x1xf32>
    %cst_12 = arith.constant dense<0.000000e+00> : vector<20x128xf32>
    %48 = tpu.matmul %44, %43, %cst_12 {dimension_numbers = #tpu.dot_dimension_numbers<[1], [0], [0], [1], [0, 0, 1, 1], [], []>} : vector<20x14xf32>, vector<14x128xf32>, vector<20x128xf32> -> vector<20x128xf32>
    %49 = vector.broadcast %45 : vector<20x1xf32> to vector<20x128xf32>
    %50 = arith.addf %48, %49 : vector<20x128xf32>
    %51 = vector.broadcast %5 : vector<1x128xf32> to vector<20x128xf32>
    %52 = arith.mulf %50, %51 : vector<20x128xf32>
    %cst_13 = arith.constant dense<0.000000e+00> : vector<20xf32>
    %53 = vector.multi_reduction <add>, %52, %cst_13 [1] : vector<20x128xf32> to vector<20xf32>
    %54 = vector.shape_cast %53 : vector<20xf32> to vector<20x1xf32>
    %cst_14 = arith.constant 5.000000e-01 : f32
    %55 = vector.broadcast %cst_14 : f32 to vector<20x1xf32>
    %56 = arith.mulf %54, %55 : vector<20x1xf32>
    %57 = vector.broadcast %56 : vector<20x1xf32> to vector<20x128xf32>
    %58 = arith.subf %50, %57 : vector<20x128xf32>
    %59 = arith.mulf %58, %58 : vector<20x128xf32>
    %60 = vector.broadcast %5 : vector<1x128xf32> to vector<20x128xf32>
    %61 = arith.mulf %59, %60 : vector<20x128xf32>
    %cst_15 = arith.constant dense<0.000000e+00> : vector<20xf32>
    %62 = vector.multi_reduction <add>, %61, %cst_15 [1] : vector<20x128xf32> to vector<20xf32>
    %63 = vector.shape_cast %62 : vector<20xf32> to vector<20x1xf32>
    %cst_16 = arith.constant 5.000000e-01 : f32
    %64 = vector.broadcast %cst_16 : f32 to vector<20x1xf32>
    %65 = arith.mulf %63, %64 : vector<20x1xf32>
    %cst_17 = arith.constant 9.99999974E-6 : f32
    %66 = vector.broadcast %cst_17 : f32 to vector<20x1xf32>
    %67 = arith.addf %65, %66 : vector<20x1xf32>
    %68 = math.rsqrt %67 : vector<20x1xf32>
    %69 = vector.broadcast %68 : vector<20x1xf32> to vector<20x128xf32>
    %70 = arith.mulf %58, %69 : vector<20x128xf32>
    %71 = vector.broadcast %46 : vector<20x1xf32> to vector<20x128xf32>
    %72 = arith.mulf %70, %71 : vector<20x128xf32>
    %73 = vector.broadcast %47 : vector<20x1xf32> to vector<20x128xf32>
    %74 = arith.addf %72, %73 : vector<20x128xf32>
    %75 = arith.negf %74 : vector<20x128xf32>
    %76 = math.exp %75 : vector<20x128xf32>
    %cst_18 = arith.constant 1.000000e+00 : f32
    %77 = vector.broadcast %cst_18 : f32 to vector<20x128xf32>
    %78 = arith.addf %77, %76 : vector<20x128xf32>
    %79 = arith.divf %77, %78 : vector<20x128xf32>
    %80 = arith.mulf %74, %79 : vector<20x128xf32>
    %c40 = arith.constant 40 : index
    %c0_19 = arith.constant 0 : index
    %81 = vector.load %arg1[%c40, %c0_19] : memref<120x40xf32, #tpu.memory_space<vmem>>, vector<25x20xf32>
    %82 = vector.extract_strided_slice %0 {offsets = [0, 2], sizes = [25, 1], strides = [1, 1]} : vector<40x13xf32> to vector<25x1xf32>
    %83 = vector.extract_strided_slice %0 {offsets = [0, 7], sizes = [25, 1], strides = [1, 1]} : vector<40x13xf32> to vector<25x1xf32>
    %84 = vector.extract_strided_slice %0 {offsets = [0, 11], sizes = [25, 1], strides = [1, 1]} : vector<40x13xf32> to vector<25x1xf32>
    %cst_20 = arith.constant dense<0.000000e+00> : vector<25x128xf32>
    %85 = tpu.matmul %81, %80, %cst_20 {dimension_numbers = #tpu.dot_dimension_numbers<[1], [0], [0], [1], [0, 0, 1, 1], [], []>} : vector<25x20xf32>, vector<20x128xf32>, vector<25x128xf32> -> vector<25x128xf32>
    %86 = vector.broadcast %82 : vector<25x1xf32> to vector<25x128xf32>
    %87 = arith.addf %85, %86 : vector<25x128xf32>
    %88 = vector.broadcast %5 : vector<1x128xf32> to vector<25x128xf32>
    %89 = arith.mulf %87, %88 : vector<25x128xf32>
    %cst_21 = arith.constant dense<0.000000e+00> : vector<25xf32>
    %90 = vector.multi_reduction <add>, %89, %cst_21 [1] : vector<25x128xf32> to vector<25xf32>
    %91 = vector.shape_cast %90 : vector<25xf32> to vector<25x1xf32>
    %cst_22 = arith.constant 5.000000e-01 : f32
    %92 = vector.broadcast %cst_22 : f32 to vector<25x1xf32>
    %93 = arith.mulf %91, %92 : vector<25x1xf32>
    %94 = vector.broadcast %93 : vector<25x1xf32> to vector<25x128xf32>
    %95 = arith.subf %87, %94 : vector<25x128xf32>
    %96 = arith.mulf %95, %95 : vector<25x128xf32>
    %97 = vector.broadcast %5 : vector<1x128xf32> to vector<25x128xf32>
    %98 = arith.mulf %96, %97 : vector<25x128xf32>
    %cst_23 = arith.constant dense<0.000000e+00> : vector<25xf32>
    %99 = vector.multi_reduction <add>, %98, %cst_23 [1] : vector<25x128xf32> to vector<25xf32>
    %100 = vector.shape_cast %99 : vector<25xf32> to vector<25x1xf32>
    %cst_24 = arith.constant 5.000000e-01 : f32
    %101 = vector.broadcast %cst_24 : f32 to vector<25x1xf32>
    %102 = arith.mulf %100, %101 : vector<25x1xf32>
    %cst_25 = arith.constant 9.99999974E-6 : f32
    %103 = vector.broadcast %cst_25 : f32 to vector<25x1xf32>
    %104 = arith.addf %102, %103 : vector<25x1xf32>
    %105 = math.rsqrt %104 : vector<25x1xf32>
    %106 = vector.broadcast %105 : vector<25x1xf32> to vector<25x128xf32>
    %107 = arith.mulf %95, %106 : vector<25x128xf32>
    %108 = vector.broadcast %83 : vector<25x1xf32> to vector<25x128xf32>
    %109 = arith.mulf %107, %108 : vector<25x128xf32>
    %110 = vector.broadcast %84 : vector<25x1xf32> to vector<25x128xf32>
    %111 = arith.addf %109, %110 : vector<25x128xf32>
    %112 = arith.negf %111 : vector<25x128xf32>
    %113 = math.exp %112 : vector<25x128xf32>
    %cst_26 = arith.constant 1.000000e+00 : f32
    %114 = vector.broadcast %cst_26 : f32 to vector<25x128xf32>
    %115 = arith.addf %114, %113 : vector<25x128xf32>
    %116 = arith.divf %114, %115 : vector<25x128xf32>
    %117 = arith.mulf %111, %116 : vector<25x128xf32>
    %c72 = arith.constant 72 : index
    %c0_27 = arith.constant 0 : index
    %118 = vector.load %arg1[%c72, %c0_27] : memref<120x40xf32, #tpu.memory_space<vmem>>, vector<40x25xf32>
    %119 = vector.extract_strided_slice %0 {offsets = [0, 3], sizes = [40, 1], strides = [1, 1]} : vector<40x13xf32> to vector<40x1xf32>
    %120 = vector.extract_strided_slice %0 {offsets = [0, 8], sizes = [40, 1], strides = [1, 1]} : vector<40x13xf32> to vector<40x1xf32>
    %121 = vector.extract_strided_slice %0 {offsets = [0, 12], sizes = [40, 1], strides = [1, 1]} : vector<40x13xf32> to vector<40x1xf32>
    %cst_28 = arith.constant dense<0.000000e+00> : vector<40x128xf32>
    %122 = tpu.matmul %118, %117, %cst_28 {dimension_numbers = #tpu.dot_dimension_numbers<[1], [0], [0], [1], [0, 0, 1, 1], [], []>} : vector<40x25xf32>, vector<25x128xf32>, vector<40x128xf32> -> vector<40x128xf32>
    %123 = vector.broadcast %119 : vector<40x1xf32> to vector<40x128xf32>
    %124 = arith.addf %122, %123 : vector<40x128xf32>
    %125 = vector.broadcast %5 : vector<1x128xf32> to vector<40x128xf32>
    %126 = arith.mulf %124, %125 : vector<40x128xf32>
    %cst_29 = arith.constant dense<0.000000e+00> : vector<40xf32>
    %127 = vector.multi_reduction <add>, %126, %cst_29 [1] : vector<40x128xf32> to vector<40xf32>
    %128 = vector.shape_cast %127 : vector<40xf32> to vector<40x1xf32>
    %cst_30 = arith.constant 5.000000e-01 : f32
    %129 = vector.broadcast %cst_30 : f32 to vector<40x1xf32>
    %130 = arith.mulf %128, %129 : vector<40x1xf32>
    %131 = vector.broadcast %130 : vector<40x1xf32> to vector<40x128xf32>
    %132 = arith.subf %124, %131 : vector<40x128xf32>
    %133 = arith.mulf %132, %132 : vector<40x128xf32>
    %134 = vector.broadcast %5 : vector<1x128xf32> to vector<40x128xf32>
    %135 = arith.mulf %133, %134 : vector<40x128xf32>
    %cst_31 = arith.constant dense<0.000000e+00> : vector<40xf32>
    %136 = vector.multi_reduction <add>, %135, %cst_31 [1] : vector<40x128xf32> to vector<40xf32>
    %137 = vector.shape_cast %136 : vector<40xf32> to vector<40x1xf32>
    %cst_32 = arith.constant 5.000000e-01 : f32
    %138 = vector.broadcast %cst_32 : f32 to vector<40x1xf32>
    %139 = arith.mulf %137, %138 : vector<40x1xf32>
    %cst_33 = arith.constant 9.99999974E-6 : f32
    %140 = vector.broadcast %cst_33 : f32 to vector<40x1xf32>
    %141 = arith.addf %139, %140 : vector<40x1xf32>
    %142 = math.rsqrt %141 : vector<40x1xf32>
    %143 = vector.broadcast %142 : vector<40x1xf32> to vector<40x128xf32>
    %144 = arith.mulf %132, %143 : vector<40x128xf32>
    %145 = vector.broadcast %120 : vector<40x1xf32> to vector<40x128xf32>
    %146 = arith.mulf %144, %145 : vector<40x128xf32>
    %147 = vector.broadcast %121 : vector<40x1xf32> to vector<40x128xf32>
    %148 = arith.addf %146, %147 : vector<40x128xf32>
    %149 = arith.negf %148 : vector<40x128xf32>
    %150 = math.exp %149 : vector<40x128xf32>
    %cst_34 = arith.constant 1.000000e+00 : f32
    %151 = vector.broadcast %cst_34 : f32 to vector<40x128xf32>
    %152 = arith.addf %151, %150 : vector<40x128xf32>
    %153 = arith.divf %151, %152 : vector<40x128xf32>
    %154 = arith.mulf %148, %153 : vector<40x128xf32>
    %c112 = arith.constant 112 : index
    %c0_35 = arith.constant 0 : index
    %155 = vector.load %arg1[%c112, %c0_35] : memref<120x40xf32, #tpu.memory_space<vmem>>, vector<5x40xf32>
    %156 = vector.extract_strided_slice %0 {offsets = [0, 4], sizes = [5, 1], strides = [1, 1]} : vector<40x13xf32> to vector<5x1xf32>
    %cst_36 = arith.constant dense<0.000000e+00> : vector<5x128xf32>
    %157 = tpu.matmul %155, %154, %cst_36 {dimension_numbers = #tpu.dot_dimension_numbers<[1], [0], [0], [1], [0, 0, 1, 1], [], []>} : vector<5x40xf32>, vector<40x128xf32>, vector<5x128xf32> -> vector<5x128xf32>
    %158 = vector.broadcast %156 : vector<5x1xf32> to vector<5x128xf32>
    %159 = arith.addf %157, %158 : vector<5x128xf32>
    %c0_37 = arith.constant 0 : index
    %c0_38 = arith.constant 0 : index
    %160 = vector.load %arg3[%c0_37, %c0_38] : memref<5x128xf32, #tpu.memory_space<vmem>>, vector<5x128xf32>
    tpu.vector_store %arg3[%c0_37, %c0_38], %159 {strides = array<i32>} : memref<5x128xf32, #tpu.memory_space<vmem>>, vector<5x128xf32>,
    return
  }
}

</mosaic_0001>

<llo_original>
// kernel: tpu_custom_call.1
$region0: #{tpu_custom_call.1}
  #allocation0 [shape = 'u32[]', space=smem, size = 0x4, offset = 0x4, fixed_abs, tag = 'smem constant byte address 0x4 - core index']
  #allocation1 [shape = 'u32[72,128]{1,0:T(1,128)}', space=vmem, size = 0x9000, scoped, tag = 'internal scratch']
  %s0 = inlined_call_operand.vmem [shape: f32[4,128], index: 0, kind: input, shape index: {}]
  %s1 = inlined_call_operand.vmem [shape: f32[120,40], index: 1, kind: input, shape index: {}]
  %s2 = inlined_call_operand.vmem [shape: f32[40,13], index: 2, kind: input, shape index: {}]
  %s3 = inlined_call_operand.hbm [shape: f32[5,128], index: 3, kind: output, shape index: {}]
  %s4 = sld [smem:[#allocation0]]
  $region22: #{tpu_custom_call.1} parent=0
    _
  %s6 = ssub.s32 1, %s4
  %s7 = scalar_select 0, %s6, %s4
  $region1: #{tpu_custom_call.1} parent=0
    #allocation2 [shape = 'u8[4096]{0}', space=vmem, size = 0x1000, scoped, tag = 'output window, operand 0, single buffered']
    #allocation3 [shape = 's32[1]{0}', space=sflag, size = 0x4, scoped, tag = 'scoped memory for tpu_custom_call.1']
    %8 = vsyncpa [#allocation3], 0
    // Predicated region
    $region2: #{tpu_custom_call.1} parent=1 // pred_check
      _
    $region3: #{tpu_custom_call.1} parent=1 // pred_check_branch
      %10 = sbr.rel (0) target = $region5
    $region4: #{tpu_custom_call.1} parent=1 // pred_region
      _
    $region5: #{tpu_custom_call.1} parent=1 // pred_fallthru
      _
    // Predicated region
    $region6: #{tpu_custom_call.1} parent=1 // pred_check
      _
    $region7: #{tpu_custom_call.1} parent=1 // pred_check_branch
      %12 = sbr.rel (0) target = $region9
    $region8: #{tpu_custom_call.1} parent=1 // pred_region
      _
    $region9: #{tpu_custom_call.1} parent=1 // pred_fallthru
      _
    // Predicated region
    $region10: #{tpu_custom_call.1} parent=1 // pred_check
      _
    $region11: #{tpu_custom_call.1} parent=1 // pred_check_branch
      %14 = sbr.rel (0) target = $region13
    $region12: #{tpu_custom_call.1} parent=1 // pred_region
      _
    $region13: #{tpu_custom_call.1} parent=1 // pred_fallthru
      _
    %v15 = vld [vmem:[%s2] sm:$0xff]
    %v16 = vld [vmem:[%s2 + $0x8] sm:$0xff]
    %v17 = vld [vmem:[%s2 + $0x10] sm:$0xff]
    %v18 = vld [vmem:[%s2 + $0x18] sm:$0xff]
    %v19 = vld [vmem:[%s2 + $0x20] sm:$0xff]
    %v20 = vlaneseq
    %v21 = vand.u32 %v20, 127
    %vm22 = vcmp.lt.s32.totalorder %v21, 2
    %v23 = vsel %vm22, 1, 0
    %v24 = vcvt.s32.f32 %v23
    %v25 = vld [vmem:[%s0] sm:$0xf]
    %v26 = vld [vmem:[%s1] sm:$0xff]
    %v27 = vld [vmem:[%s1 + $0x8] sm:$0x3f]
    %29 = vset.pattern.permute.xlu0 0
    %30 = vperm.xlu0 %29, %v15
    %v31 = vpop.permute.xlu0 %30
    %34 = vset.pattern.permute.xlu0 0
    %35 = vperm.xlu0 %34, %v16
    %v36 = vpop.permute.xlu0 %35
    %vm38 = vcmask 31744
    %v40 = vsel %vm38, %v26, 0
    %v43 = vsel %vm38, %v27, 0
    %vm45 = vcmask 1043456
    %v47 = vsel %vm45, %v25, 0
    %49 = vmatpush.msra.mxu0 0.0
    %50 = vmatpush.msra.mxu0 0.0
    %51 = vmatpush.msra.mxu0 0.0
    %52 = vmatpush.msra.mxu0 0.0
    %53 = vmatpush.msra.mxu0 0.0
    %54 = vmatpush.msra.mxu0 0.0
    %55 = vmatpush.msra.mxu0 0.0
    %56 = vmatpush.msra.mxu0 0.0
    %57 = vmatpush.msra.mxu0 0.0
    %58 = vmatpush.msra.mxu0 0.0
    %59 = vmatpush.msra.mxu0 0.0
    %60 = vmatpush.msra.mxu0 0.0
    %61 = vmatpush.msra.mxu0 0.0
    %62 = vmatpush.msra.mxu0 0.0
    %63 = vmatpush.msra.mxu0 0.0
    %64 = vmatpush.msra.mxu0 %v47
    %65 = vmatmul.f32.gmra.mxu0 %v40
    %v66 = vpop.f32.mrf.mxu0
    %v67 = vadd.f32 %v31, %v66
    %68 = vmatmul.f32.gmra.mxu0 %v43
    %v69 = vpop.f32.mrf.mxu0
    %v70 = vadd.f32 %v36, %v69
    %71 = vdwg.mxu0
    %v72 = vmul.f32 %v67, %v24
    %v73 = vmul.f32 %v70, %v24
    %74 = vadd.xlane.f32.xlu0 %v72
    %v75 = vpop.xlane.xlu0 %74
    %vm76 = vcmask 1045504
    %v77 = vsel %vm76, %v73, 0.0
    %78 = vadd.xlane.f32.xlu0 %v77
    %v79 = vpop.xlane.xlu0 %78
    %v80 = vmul.f32 %v75, 0.5
    %v81 = vmul.f32 %v79, 0.5
    %v82 = vsub.f32 %v67, %v80
    %v83 = vsub.f32 %v70, %v81
    %v84 = vmul.f32 %v82, %v82
    %v85 = vmul.f32 %v83, %v83
    %v86 = vmul.f32 %v84, %v24
    %v87 = vmul.f32 %v85, %v24
    %88 = vadd.xlane.f32.xlu0 %v86
    %v89 = vpop.xlane.xlu0 %88
    %v90 = vsel %vm76, %v87, 0.0
    %91 = vadd.xlane.f32.xlu0 %v90
    %v92 = vpop.xlane.xlu0 %91
    %v93 = vmul.f32 %v89, 0.5
    %v94 = vmul.f32 %v92, 0.5
    %v95 = vadd.f32 %v93, 1e-05
    %v96 = vadd.f32 %v94, 1e-05
    %v97 = vrsqrt.pop %v95
    %v98 = vmul.f32 %v97, %v95
    %v99 = vmul.f32 %v98, %v97
    %v100 = vmul.f32 0.5, %v99
    %v101 = vsub.f32 1.5, %v100
    %v102 = vmul.f32 %v97, %v101
    %vm103 = vweird.f32 %v95
    %vm104 = vweird.f32 %v97
    %vm105 = vmor %vm103, %vm104
    %v106 = vsel %vm105, %v97, %v102
    %v107 = vrsqrt.pop %v96
    %v108 = vmul.f32 %v107, %v96
    %v109 = vmul.f32 %v108, %v107
    %v110 = vmul.f32 0.5, %v109
    %v111 = vsub.f32 1.5, %v110
    %v112 = vmul.f32 %v107, %v111
    %vm113 = vweird.f32 %v96
    %vm114 = vweird.f32 %v107
    %vm115 = vmor %vm113, %vm114
    %v116 = vsel %vm115, %v107, %v112
    %v117 = vmul.f32 %v82, %v106
    %v118 = vmul.f32 %v83, %v116
    %119 = vset.pattern.permute.xlu0 5
    %120 = vperm.xlu0 %119, %v15
    %v121 = vpop.permute.xlu0 %120
    %123 = vset.pattern.permute.xlu0 5
    %124 = vperm.xlu0 %123, %v16
    %v125 = vpop.permute.xlu0 %124
    %v127 = vmul.f32 %v117, %v121
    %v128 = vmul.f32 %v118, %v125
    %129 = vset.pattern.permute.xlu0 9
    %130 = vperm.xlu0 %129, %v15
    %v131 = vpop.permute.xlu0 %130
    %133 = vset.pattern.permute.xlu0 9
    %134 = vperm.xlu0 %133, %v16
    %v135 = vpop.permute.xlu0 %134
    %v137 = vadd.f32 %v127, %v131
    %v138 = vadd.f32 %v128, %v135
    %v139 = vxor.u32 %v137, 2147483648
    %v140 = vxor.u32 %v138, 2147483648
    %v141 = vmul.f32 %v139, 1.442695
    %v142 = vpow.pop %v141
    %v143 = vmul.f32 %v140, 1.442695
    %v144 = vpow.pop %v143
    %v145 = vadd.f32 %v142, 1.0
    %v146 = vadd.f32 %v144, 1.0
    %v147 = vrcp.pop %v145
    %v148 = vmul.f32 %v145, %v147
    %v149 = vsub.f32 1.0, %v148
    %v150 = vmul.f32 %v147, %v149
    %v151 = vadd.f32 %v147, %v150
    %vm152 = vweird.f32 %v145
    %vm153 = vweird.f32 %v147
    %vm154 = vmor %vm152, %vm153
    %v155 = vsel %vm154, %v147, %v151
    %v156 = vand.u32 2147483647, %v145
    %vm157 = vcmp.eq.f32.partialorder %v156, 8.507059e+37
    %v158 = vand.u32 %v145, 2147483648
    %v159 = vor.u32 1.1754944e-38, %v158
    %v160 = vsel %vm157, %v159, %v155
    %v161 = vmul.f32 1.0, %v160
    %v162 = vrcp.pop %v146
    %v163 = vmul.f32 %v146, %v162
    %v164 = vsub.f32 1.0, %v163
    %v165 = vmul.f32 %v162, %v164
    %v166 = vadd.f32 %v162, %v165
    %vm167 = vweird.f32 %v146
    %vm168 = vweird.f32 %v162
    %vm169 = vmor %vm167, %vm168
    %v170 = vsel %vm169, %v162, %v166
    %v171 = vand.u32 2147483647, %v146
    %vm172 = vcmp.eq.f32.partialorder %v171, 8.507059e+37
    %v173 = vand.u32 %v146, 2147483648
    %v174 = vor.u32 1.1754944e-38, %v173
    %v175 = vsel %vm172, %v174, %v170
    %v176 = vmul.f32 1.0, %v175
    %v177 = vmul.f32 %v137, %v161
    %v178 = vmul.f32 %v138, %v176
    %v179 = vld [vmem:[%s1 + $0x10] sm:$0xff]
    %v180 = vld [vmem:[%s1 + $0x18] sm:$0xff]
    %v181 = vld [vmem:[%s1 + $0x20] sm:$0xf]
    %182 = vset.pattern.permute.xlu0 1
    %183 = vperm.xlu0 %182, %v15
    %v184 = vpop.permute.xlu0 %183
    %186 = vset.pattern.permute.xlu0 1
    %187 = vperm.xlu0 %186, %v16
    %v188 = vpop.permute.xlu0 %187
    %191 = vset.pattern.permute.xlu0 1
    %192 = vperm.xlu0 %191, %v17
    %v193 = vpop.permute.xlu0 %192
    %vm195 = vcmask 113664
    %v197 = vsel %vm195, %v179, 0
    %v200 = vsel %vm195, %v180, 0
    %v203 = vsel %vm195, %v181, 0
    %v206 = vsel %vm76, %v178, 0
    %208 = vmatpush.msra.mxu0 0.0
    %209 = vmatpush.msra.mxu0 0.0
    %210 = vmatpush.msra.mxu0 0.0
    %211 = vmatpush.msra.mxu0 0.0
    %212 = vmatpush.msra.mxu0 0.0
    %213 = vmatpush.msra.mxu0 0.0
    %214 = vmatpush.msra.mxu0 0.0
    %215 = vmatpush.msra.mxu0 0.0
    %216 = vmatpush.msra.mxu0 0.0
    %217 = vmatpush.msra.mxu0 0.0
    %218 = vmatpush.msra.mxu0 0.0
    %219 = vmatpush.msra.mxu0 0.0
    %220 = vmatpush.msra.mxu0 0.0
    %221 = vmatpush.msra.mxu0 0.0
    %222 = vmatpush.msra.mxu0 %v206
    %223 = vmatpush.msra.mxu0 %v177
    %224 = vmatmul.f32.gmra.mxu0 %v197
    %v225 = vpop.f32.mrf.mxu0
    %v226 = vadd.f32 %v184, %v225
    %227 = vmatmul.f32.gmra.mxu0 %v200
    %v228 = vpop.f32.mrf.mxu0
    %v229 = vadd.f32 %v188, %v228
    %230 = vmatmul.f32.gmra.mxu0 %v203
    %v231 = vpop.f32.mrf.mxu0
    %v232 = vadd.f32 %v193, %v231
    %233 = vdwg.mxu0
    %v234 = vmul.f32 %v226, %v24
    %v235 = vmul.f32 %v229, %v24
    %v236 = vmul.f32 %v232, %v24
    %237 = vadd.xlane.f32.xlu0 %v234
    %v238 = vpop.xlane.xlu0 %237
    %239 = vadd.xlane.f32.xlu0 %v235
    %v240 = vpop.xlane.xlu0 %239
    %v241 = vsel %vm45, %v236, 0.0
    %242 = vadd.xlane.f32.xlu0 %v241
    %v243 = vpop.xlane.xlu0 %242
    %v244 = vmul.f32 %v238, 0.5
    %v245 = vmul.f32 %v240, 0.5
    %v246 = vmul.f32 %v243, 0.5
    %v247 = vsub.f32 %v226, %v244
    %v248 = vsub.f32 %v229, %v245
    %v249 = vsub.f32 %v232, %v246
    %v250 = vmul.f32 %v247, %v247
    %v251 = vmul.f32 %v248, %v248
    %v252 = vmul.f32 %v249, %v249
    %v253 = vmul.f32 %v250, %v24
    %v254 = vmul.f32 %v251, %v24
    %v255 = vmul.f32 %v252, %v24
    %256 = vadd.xlane.f32.xlu0 %v253
    %v257 = vpop.xlane.xlu0 %256
    %258 = vadd.xlane.f32.xlu0 %v254
    %v259 = vpop.xlane.xlu0 %258
    %v260 = vsel %vm45, %v255, 0.0
    %261 = vadd.xlane.f32.xlu0 %v260
    %v262 = vpop.xlane.xlu0 %261
    %v263 = vmul.f32 %v257, 0.5
    %v264 = vmul.f32 %v259, 0.5
    %v265 = vmul.f32 %v262, 0.5
    %v266 = vadd.f32 %v263, 1e-05
    %v267 = vadd.f32 %v264, 1e-05
    %v268 = vadd.f32 %v265, 1e-05
    %v269 = vrsqrt.pop %v266
    %v270 = vmul.f32 %v269, %v266
    %v271 = vmul.f32 %v270, %v269
    %v272 = vmul.f32 0.5, %v271
    %v273 = vsub.f32 1.5, %v272
    %v274 = vmul.f32 %v269, %v273
    %vm275 = vweird.f32 %v266
    %vm276 = vweird.f32 %v269
    %vm277 = vmor %vm275, %vm276
    %v278 = vsel %vm277, %v269, %v274
    %v279 = vrsqrt.pop %v267
    %v280 = vmul.f32 %v279, %v267
    %v281 = vmul.f32 %v280, %v279
    %v282 = vmul.f32 0.5, %v281
    %v283 = vsub.f32 1.5, %v282
    %v284 = vmul.f32 %v279, %v283
    %vm285 = vweird.f32 %v267
    %vm286 = vweird.f32 %v279
    %vm287 = vmor %vm285, %vm286
    %v288 = vsel %vm287, %v279, %v284
    %v289 = vrsqrt.pop %v268
    %v290 = vmul.f32 %v289, %v268
    %v291 = vmul.f32 %v290, %v289
    %v292 = vmul.f32 0.5, %v291
    %v293 = vsub.f32 1.5, %v292
    %v294 = vmul.f32 %v289, %v293
    %vm295 = vweird.f32 %v268
    %vm296 = vweird.f32 %v289
    %vm297 = vmor %vm295, %vm296
    %v298 = vsel %vm297, %v289, %v294
    %v299 = vmul.f32 %v247, %v278
    %v300 = vmul.f32 %v248, %v288
    %v301 = vmul.f32 %v249, %v298
    %302 = vset.pattern.permute.xlu0 6
    %303 = vperm.xlu0 %302, %v15
    %v304 = vpop.permute.xlu0 %303
    %306 = vset.pattern.permute.xlu0 6
    %307 = vperm.xlu0 %306, %v16
    %v308 = vpop.permute.xlu0 %307
    %310 = vset.pattern.permute.xlu0 6
    %311 = vperm.xlu0 %310, %v17
    %v312 = vpop.permute.xlu0 %311
    %v314 = vmul.f32 %v299, %v304
    %v315 = vmul.f32 %v300, %v308
    %v316 = vmul.f32 %v301, %v312
    %317 = vset.pattern.permute.xlu0 10
    %318 = vperm.xlu0 %317, %v15
    %v319 = vpop.permute.xlu0 %318
    %321 = vset.pattern.permute.xlu0 10
    %322 = vperm.xlu0 %321, %v16
    %v323 = vpop.permute.xlu0 %322
    %325 = vset.pattern.permute.xlu0 10
    %326 = vperm.xlu0 %325, %v17
    %v327 = vpop.permute.xlu0 %326
    %v329 = vadd.f32 %v314, %v319
    %v330 = vadd.f32 %v315, %v323
    %v331 = vadd.f32 %v316, %v327
    %v332 = vxor.u32 %v329, 2147483648
    %v333 = vxor.u32 %v330, 2147483648
    %v334 = vxor.u32 %v331, 2147483648
    %v335 = vmul.f32 %v332, 1.442695
    %v336 = vpow.pop %v335
    %v337 = vmul.f32 %v333, 1.442695
    %v338 = vpow.pop %v337
    %v339 = vmul.f32 %v334, 1.442695
    %v340 = vpow.pop %v339
    %v341 = vadd.f32 %v336, 1.0
    %v342 = vadd.f32 %v338, 1.0
    %v343 = vadd.f32 %v340, 1.0
    %v344 = vrcp.pop %v341
    %v345 = vmul.f32 %v341, %v344
    %v346 = vsub.f32 1.0, %v345
    %v347 = vmul.f32 %v344, %v346
    %v348 = vadd.f32 %v344, %v347
    %vm349 = vweird.f32 %v341
    %vm350 = vweird.f32 %v344
    %vm351 = vmor %vm349, %vm350
    %v352 = vsel %vm351, %v344, %v348
    %v353 = vand.u32 2147483647, %v341
    %vm354 = vcmp.eq.f32.partialorder %v353, 8.507059e+37
    %v355 = vand.u32 %v341, 2147483648
    %v356 = vor.u32 1.1754944e-38, %v355
    %v357 = vsel %vm354, %v356, %v352
    %v358 = vmul.f32 1.0, %v357
    %v359 = vrcp.pop %v342
    %v360 = vmul.f32 %v342, %v359
    %v361 = vsub.f32 1.0, %v360
    %v362 = vmul.f32 %v359, %v361
    %v363 = vadd.f32 %v359, %v362
    %vm364 = vweird.f32 %v342
    %vm365 = vweird.f32 %v359
    %vm366 = vmor %vm364, %vm365
    %v367 = vsel %vm366, %v359, %v363
    %v368 = vand.u32 2147483647, %v342
    %vm369 = vcmp.eq.f32.partialorder %v368, 8.507059e+37
    %v370 = vand.u32 %v342, 2147483648
    %v371 = vor.u32 1.1754944e-38, %v370
    %v372 = vsel %vm369, %v371, %v367
    %v373 = vmul.f32 1.0, %v372
    %v374 = vrcp.pop %v343
    %v375 = vmul.f32 %v343, %v374
    %v376 = vsub.f32 1.0, %v375
    %v377 = vmul.f32 %v374, %v376
    %v378 = vadd.f32 %v374, %v377
    %vm379 = vweird.f32 %v343
    %vm380 = vweird.f32 %v374
    %vm381 = vmor %vm379, %vm380
    %v382 = vsel %vm381, %v374, %v378
    %v383 = vand.u32 2147483647, %v343
    %vm384 = vcmp.eq.f32.partialorder %v383, 8.507059e+37
    %v385 = vand.u32 %v343, 2147483648
    %v386 = vor.u32 1.1754944e-38, %v385
    %v387 = vsel %vm384, %v386, %v382
    %v388 = vmul.f32 1.0, %v387
    %v389 = vmul.f32 %v329, %v358
    %v390 = vmul.f32 %v330, %v373
    %v391 = vmul.f32 %v331, %v388
    %v392 = vld [vmem:[%s1 + $0x28] sm:$0xff]
    %v393 = vld [vmem:[%s1 + $0x30] sm:$0xff]
    %v394 = vld [vmem:[%s1 + $0x38] sm:$0xff]
    %v395 = vld [vmem:[%s1 + $0x40] sm:$0x1]
    %396 = vset.pattern.permute.xlu0 2
    %397 = vperm.xlu0 %396, %v15
    %v398 = vpop.permute.xlu0 %397
    %400 = vset.pattern.permute.xlu0 2
    %401 = vperm.xlu0 %400, %v16
    %v402 = vpop.permute.xlu0 %401
    %404 = vset.pattern.permute.xlu0 2
    %405 = vperm.xlu0 %404, %v17
    %v406 = vpop.permute.xlu0 %405
    %409 = vset.pattern.permute.xlu0 2
    %410 = vperm.xlu0 %409, %v18
    %v411 = vpop.permute.xlu0 %410
    %vm413 = vcmask 162816
    %v415 = vsel %vm413, %v392, 0
    %v418 = vsel %vm413, %v393, 0
    %v421 = vsel %vm413, %v394, 0
    %v424 = vsel %vm413, %v395, 0
    %v427 = vsel %vm45, %v391, 0
    %429 = vmatpush.msra.mxu0 0.0
    %430 = vmatpush.msra.mxu0 0.0
    %431 = vmatpush.msra.mxu0 0.0
    %432 = vmatpush.msra.mxu0 0.0
    %433 = vmatpush.msra.mxu0 0.0
    %434 = vmatpush.msra.mxu0 0.0
    %435 = vmatpush.msra.mxu0 0.0
    %436 = vmatpush.msra.mxu0 0.0
    %437 = vmatpush.msra.mxu0 0.0
    %438 = vmatpush.msra.mxu0 0.0
    %439 = vmatpush.msra.mxu0 0.0
    %440 = vmatpush.msra.mxu0 0.0
    %441 = vmatpush.msra.mxu0 0.0
    %442 = vmatpush.msra.mxu0 %v427
    %443 = vmatpush.msra.mxu0 %v390
    %444 = vmatpush.msra.mxu0 %v389
    %445 = vmatmul.f32.gmra.mxu0 %v415
    %v446 = vpop.f32.mrf.mxu0
    %v447 = vadd.f32 %v398, %v446
    %448 = vmatmul.f32.gmra.mxu0 %v418
    %v449 = vpop.f32.mrf.mxu0
    %v450 = vadd.f32 %v402, %v449
    %451 = vmatmul.f32.gmra.mxu0 %v421
    %v452 = vpop.f32.mrf.mxu0
    %v453 = vadd.f32 %v406, %v452
    %454 = vmatmul.f32.gmra.mxu0 %v424
    %v455 = vpop.f32.mrf.mxu0
    %v456 = vadd.f32 %v411, %v455
    %457 = vdwg.mxu0
    %v458 = vmul.f32 %v447, %v24
    %v459 = vmul.f32 %v450, %v24
    %v460 = vmul.f32 %v453, %v24
    %v461 = vmul.f32 %v456, %v24
    %462 = vadd.xlane.f32.xlu0 %v458
    %v463 = vpop.xlane.xlu0 %462
    %464 = vadd.xlane.f32.xlu0 %v459
    %v465 = vpop.xlane.xlu0 %464
    %466 = vadd.xlane.f32.xlu0 %v460
    %v467 = vpop.xlane.xlu0 %466
    %vm468 = vcmask 1040384
    %v469 = vsel %vm468, %v461, 0.0
    %470 = vadd.xlane.f32.xlu0 %v469
    %v471 = vpop.xlane.xlu0 %470
    %v472 = vmul.f32 %v463, 0.5
    %v473 = vmul.f32 %v465, 0.5
    %v474 = vmul.f32 %v467, 0.5
    %v475 = vmul.f32 %v471, 0.5
    %v476 = vsub.f32 %v447, %v472
    %v477 = vsub.f32 %v450, %v473
    %v478 = vsub.f32 %v453, %v474
    %v479 = vsub.f32 %v456, %v475
    %v480 = vmul.f32 %v476, %v476
    %v481 = vmul.f32 %v477, %v477
    %v482 = vmul.f32 %v478, %v478
    %v483 = vmul.f32 %v479, %v479
    %v484 = vmul.f32 %v480, %v24
    %v485 = vmul.f32 %v481, %v24
    %v486 = vmul.f32 %v482, %v24
    %v487 = vmul.f32 %v483, %v24
    %488 = vadd.xlane.f32.xlu0 %v484
    %v489 = vpop.xlane.xlu0 %488
    %490 = vadd.xlane.f32.xlu0 %v485
    %v491 = vpop.xlane.xlu0 %490
    %492 = vadd.xlane.f32.xlu0 %v486
    %v493 = vpop.xlane.xlu0 %492
    %v494 = vsel %vm468, %v487, 0.0
    %495 = vadd.xlane.f32.xlu0 %v494
    %v496 = vpop.xlane.xlu0 %495
    %v497 = vmul.f32 %v489, 0.5
    %v498 = vmul.f32 %v491, 0.5
    %v499 = vmul.f32 %v493, 0.5
    %v500 = vmul.f32 %v496, 0.5
    %v501 = vadd.f32 %v497, 1e-05
    %v502 = vadd.f32 %v498, 1e-05
    %v503 = vadd.f32 %v499, 1e-05
    %v504 = vadd.f32 %v500, 1e-05
    %v505 = vrsqrt.pop %v501
    %v506 = vmul.f32 %v505, %v501
    %v507 = vmul.f32 %v506, %v505
    %v508 = vmul.f32 0.5, %v507
    %v509 = vsub.f32 1.5, %v508
    %v510 = vmul.f32 %v505, %v509
    %vm511 = vweird.f32 %v501
    %vm512 = vweird.f32 %v505
    %vm513 = vmor %vm511, %vm512
    %v514 = vsel %vm513, %v505, %v510
    %v515 = vrsqrt.pop %v502
    %v516 = vmul.f32 %v515, %v502
    %v517 = vmul.f32 %v516, %v515
    %v518 = vmul.f32 0.5, %v517
    %v519 = vsub.f32 1.5, %v518
    %v520 = vmul.f32 %v515, %v519
    %vm521 = vweird.f32 %v502
    %vm522 = vweird.f32 %v515
    %vm523 = vmor %vm521, %vm522
    %v524 = vsel %vm523, %v515, %v520
    %v525 = vrsqrt.pop %v503
    %v526 = vmul.f32 %v525, %v503
    %v527 = vmul.f32 %v526, %v525
    %v528 = vmul.f32 0.5, %v527
    %v529 = vsub.f32 1.5, %v528
    %v530 = vmul.f32 %v525, %v529
    %vm531 = vweird.f32 %v503
    %vm532 = vweird.f32 %v525
    %vm533 = vmor %vm531, %vm532
    %v534 = vsel %vm533, %v525, %v530
    %v535 = vrsqrt.pop %v504
    %v536 = vmul.f32 %v535, %v504
    %v537 = vmul.f32 %v536, %v535
    %v538 = vmul.f32 0.5, %v537
    %v539 = vsub.f32 1.5, %v538
    %v540 = vmul.f32 %v535, %v539
    %vm541 = vweird.f32 %v504
    %vm542 = vweird.f32 %v535
    %vm543 = vmor %vm541, %vm542
    %v544 = vsel %vm543, %v535, %v540
    %v545 = vmul.f32 %v476, %v514
    %v546 = vmul.f32 %v477, %v524
    %v547 = vmul.f32 %v478, %v534
    %v548 = vmul.f32 %v479, %v544
    %549 = vset.pattern.permute.xlu0 7
    %550 = vperm.xlu0 %549, %v15
    %v551 = vpop.permute.xlu0 %550
    %553 = vset.pattern.permute.xlu0 7
    %554 = vperm.xlu0 %553, %v16
    %v555 = vpop.permute.xlu0 %554
    %557 = vset.pattern.permute.xlu0 7
    %558 = vperm.xlu0 %557, %v17
    %v559 = vpop.permute.xlu0 %558
    %561 = vset.pattern.permute.xlu0 7
    %562 = vperm.xlu0 %561, %v18
    %v563 = vpop.permute.xlu0 %562
    %v565 = vmul.f32 %v545, %v551
    %v566 = vmul.f32 %v546, %v555
    %v567 = vmul.f32 %v547, %v559
    %v568 = vmul.f32 %v548, %v563
    %569 = vset.pattern.permute.xlu0 11
    %570 = vperm.xlu0 %569, %v15
    %v571 = vpop.permute.xlu0 %570
    %573 = vset.pattern.permute.xlu0 11
    %574 = vperm.xlu0 %573, %v16
    %v575 = vpop.permute.xlu0 %574
    %577 = vset.pattern.permute.xlu0 11
    %578 = vperm.xlu0 %577, %v17
    %v579 = vpop.permute.xlu0 %578
    %581 = vset.pattern.permute.xlu0 11
    %582 = vperm.xlu0 %581, %v18
    %v583 = vpop.permute.xlu0 %582
    %v585 = vadd.f32 %v565, %v571
    %v586 = vadd.f32 %v566, %v575
    %v587 = vadd.f32 %v567, %v579
    %v588 = vadd.f32 %v568, %v583
    %v589 = vxor.u32 %v585, 2147483648
    %v590 = vxor.u32 %v586, 2147483648
    %v591 = vxor.u32 %v587, 2147483648
    %v592 = vxor.u32 %v588, 2147483648
    %v593 = vmul.f32 %v589, 1.442695
    %v594 = vpow.pop %v593
    %v595 = vmul.f32 %v590, 1.442695
    %v596 = vpow.pop %v595
    %v597 = vmul.f32 %v591, 1.442695
    %v598 = vpow.pop %v597
    %v599 = vmul.f32 %v592, 1.442695
    %v600 = vpow.pop %v599
    %v601 = vadd.f32 %v594, 1.0
    %v602 = vadd.f32 %v596, 1.0
    %v603 = vadd.f32 %v598, 1.0
    %v604 = vadd.f32 %v600, 1.0
    %v605 = vrcp.pop %v601
    %v606 = vmul.f32 %v601, %v605
    %v607 = vsub.f32 1.0, %v606
    %v608 = vmul.f32 %v605, %v607
    %v609 = vadd.f32 %v605, %v608
    %vm610 = vweird.f32 %v601
    %vm611 = vweird.f32 %v605
    %vm612 = vmor %vm610, %vm611
    %v613 = vsel %vm612, %v605, %v609
    %v614 = vand.u32 2147483647, %v601
    %vm615 = vcmp.eq.f32.partialorder %v614, 8.507059e+37
    %v616 = vand.u32 %v601, 2147483648
    %v617 = vor.u32 1.1754944e-38, %v616
    %v618 = vsel %vm615, %v617, %v613
    %v619 = vmul.f32 1.0, %v618
    %v620 = vrcp.pop %v602
    %v621 = vmul.f32 %v602, %v620
    %v622 = vsub.f32 1.0, %v621
    %v623 = vmul.f32 %v620, %v622
    %v624 = vadd.f32 %v620, %v623
    %vm625 = vweird.f32 %v602
    %vm626 = vweird.f32 %v620
    %vm627 = vmor %vm625, %vm626
    %v628 = vsel %vm627, %v620, %v624
    %v629 = vand.u32 2147483647, %v602
    %vm630 = vcmp.eq.f32.partialorder %v629, 8.507059e+37
    %v631 = vand.u32 %v602, 2147483648
    %v632 = vor.u32 1.1754944e-38, %v631
    %v633 = vsel %vm630, %v632, %v628
    %v634 = vmul.f32 1.0, %v633
    %v635 = vrcp.pop %v603
    %v636 = vmul.f32 %v603, %v635
    %v637 = vsub.f32 1.0, %v636
    %v638 = vmul.f32 %v635, %v637
    %v639 = vadd.f32 %v635, %v638
    %vm640 = vweird.f32 %v603
    %vm641 = vweird.f32 %v635
    %vm642 = vmor %vm640, %vm641
    %v643 = vsel %vm642, %v635, %v639
    %v644 = vand.u32 2147483647, %v603
    %vm645 = vcmp.eq.f32.partialorder %v644, 8.507059e+37
    %v646 = vand.u32 %v603, 2147483648
    %v647 = vor.u32 1.1754944e-38, %v646
    %v648 = vsel %vm645, %v647, %v643
    %v649 = vmul.f32 1.0, %v648
    %v650 = vrcp.pop %v604
    %v651 = vmul.f32 %v604, %v650
    %v652 = vsub.f32 1.0, %v651
    %v653 = vmul.f32 %v650, %v652
    %v654 = vadd.f32 %v650, %v653
    %vm655 = vweird.f32 %v604
    %vm656 = vweird.f32 %v650
    %vm657 = vmor %vm655, %vm656
    %v658 = vsel %vm657, %v650, %v654
    %v659 = vand.u32 2147483647, %v604
    %vm660 = vcmp.eq.f32.partialorder %v659, 8.507059e+37
    %v661 = vand.u32 %v604, 2147483648
    %v662 = vor.u32 1.1754944e-38, %v661
    %v663 = vsel %vm660, %v662, %v658
    %v664 = vmul.f32 1.0, %v663
    %v665 = vmul.f32 %v585, %v619
    %v666 = vmul.f32 %v586, %v634
    %v667 = vmul.f32 %v587, %v649
    %v668 = vmul.f32 %v588, %v664
    %v669 = vld [vmem:[%s1 + $0x48] sm:$0xff]
    %v670 = vld [vmem:[%s1 + $0x50] sm:$0xff]
    %v671 = vld [vmem:[%s1 + $0x58] sm:$0xff]
    %v672 = vld [vmem:[%s1 + $0x60] sm:$0xff]
    %v673 = vld [vmem:[%s1 + $0x68] sm:$0xff]
    %674 = vset.pattern.permute.xlu0 3
    %675 = vperm.xlu0 %674, %v15
    %v676 = vpop.permute.xlu0 %675
    %678 = vset.pattern.permute.xlu0 3
    %679 = vperm.xlu0 %678, %v16
    %v680 = vpop.permute.xlu0 %679
    %682 = vset.pattern.permute.xlu0 3
    %683 = vperm.xlu0 %682, %v17
    %v684 = vpop.permute.xlu0 %683
    %686 = vset.pattern.permute.xlu0 3
    %687 = vperm.xlu0 %686, %v18
    %v688 = vpop.permute.xlu0 %687
    %691 = vset.pattern.permute.xlu0 3
    %692 = vperm.xlu0 %691, %v19
    %v693 = vpop.permute.xlu0 %692
    %vm695 = vcmask 203776
    %v697 = vsel %vm695, %v669, 0
    %v700 = vsel %vm695, %v670, 0
    %v703 = vsel %vm695, %v671, 0
    %v706 = vsel %vm695, %v672, 0
    %v709 = vsel %vm695, %v673, 0
    %v712 = vsel %vm468, %v668, 0
    %714 = vmatpush.msra.mxu0 0.0
    %715 = vmatpush.msra.mxu0 0.0
    %716 = vmatpush.msra.mxu0 0.0
    %717 = vmatpush.msra.mxu0 0.0
    %718 = vmatpush.msra.mxu0 0.0
    %719 = vmatpush.msra.mxu0 0.0
    %720 = vmatpush.msra.mxu0 0.0
    %721 = vmatpush.msra.mxu0 0.0
    %722 = vmatpush.msra.mxu0 0.0
    %723 = vmatpush.msra.mxu0 0.0
    %724 = vmatpush.msra.mxu0 0.0
    %725 = vmatpush.msra.mxu0 0.0
    %726 = vmatpush.msra.mxu0 %v712
    %727 = vmatpush.msra.mxu0 %v667
    %728 = vmatpush.msra.mxu0 %v666
    %729 = vmatpush.msra.mxu0 %v665
    %730 = vmatmul.f32.gmra.mxu0 %v697
    %v731 = vpop.f32.mrf.mxu0
    %v732 = vadd.f32 %v676, %v731
    %733 = vmatmul.f32.gmra.mxu0 %v700
    %v734 = vpop.f32.mrf.mxu0
    %v735 = vadd.f32 %v680, %v734
    %736 = vmatmul.f32.gmra.mxu0 %v703
    %v737 = vpop.f32.mrf.mxu0
    %v738 = vadd.f32 %v684, %v737
    %739 = vmatmul.f32.gmra.mxu0 %v706
    %v740 = vpop.f32.mrf.mxu0
    %v741 = vadd.f32 %v688, %v740
    %742 = vmatmul.f32.gmra.mxu0 %v709
    %v743 = vpop.f32.mrf.mxu0
    %v744 = vadd.f32 %v693, %v743
    %745 = vdwg.mxu0
    %v746 = vmul.f32 %v732, %v24
    %v747 = vmul.f32 %v735, %v24
    %v748 = vmul.f32 %v738, %v24
    %v749 = vmul.f32 %v741, %v24
    %v750 = vmul.f32 %v744, %v24
    %751 = vadd.xlane.f32.xlu0 %v746
    %v752 = vpop.xlane.xlu0 %751
    %753 = vadd.xlane.f32.xlu0 %v747
    %v754 = vpop.xlane.xlu0 %753
    %755 = vadd.xlane.f32.xlu0 %v748
    %v756 = vpop.xlane.xlu0 %755
    %757 = vadd.xlane.f32.xlu0 %v749
    %v758 = vpop.xlane.xlu0 %757
    %759 = vadd.xlane.f32.xlu0 %v750
    %v760 = vpop.xlane.xlu0 %759
    %v761 = vmul.f32 %v752, 0.5
    %v762 = vmul.f32 %v754, 0.5
    %v763 = vmul.f32 %v756, 0.5
    %v764 = vmul.f32 %v758, 0.5
    %v765 = vmul.f32 %v760, 0.5
    %v766 = vsub.f32 %v732, %v761
    %v767 = vsub.f32 %v735, %v762
    %v768 = vsub.f32 %v738, %v763
    %v769 = vsub.f32 %v741, %v764
    %v770 = vsub.f32 %v744, %v765
    %v771 = vmul.f32 %v766, %v766
    %v772 = vmul.f32 %v767, %v767
    %v773 = vmul.f32 %v768, %v768
    %v774 = vmul.f32 %v769, %v769
    %v775 = vmul.f32 %v770, %v770
    %v776 = vmul.f32 %v771, %v24
    %v777 = vmul.f32 %v772, %v24
    %v778 = vmul.f32 %v773, %v24
    %v779 = vmul.f32 %v774, %v24
    %v780 = vmul.f32 %v775, %v24
    %781 = vadd.xlane.f32.xlu0 %v776
    %v782 = vpop.xlane.xlu0 %781
    %783 = vadd.xlane.f32.xlu0 %v777
    %v784 = vpop.xlane.xlu0 %783
    %785 = vadd.xlane.f32.xlu0 %v778
    %v786 = vpop.xlane.xlu0 %785
    %787 = vadd.xlane.f32.xlu0 %v779
    %v788 = vpop.xlane.xlu0 %787
    %789 = vadd.xlane.f32.xlu0 %v780
    %v790 = vpop.xlane.xlu0 %789
    %v791 = vmul.f32 %v782, 0.5
    %v792 = vmul.f32 %v784, 0.5
    %v793 = vmul.f32 %v786, 0.5
    %v794 = vmul.f32 %v788, 0.5
    %v795 = vmul.f32 %v790, 0.5
    %v796 = vadd.f32 %v791, 1e-05
    %v797 = vadd.f32 %v792, 1e-05
    %v798 = vadd.f32 %v793, 1e-05
    %v799 = vadd.f32 %v794, 1e-05
    %v800 = vadd.f32 %v795, 1e-05
    %v801 = vrsqrt.pop %v796
    %v802 = vmul.f32 %v801, %v796
    %v803 = vmul.f32 %v802, %v801
    %v804 = vmul.f32 0.5, %v803
    %v805 = vsub.f32 1.5, %v804
    %v806 = vmul.f32 %v801, %v805
    %vm807 = vweird.f32 %v796
    %vm808 = vweird.f32 %v801
    %vm809 = vmor %vm807, %vm808
    %v810 = vsel %vm809, %v801, %v806
    %v811 = vrsqrt.pop %v797
    %v812 = vmul.f32 %v811, %v797
    %v813 = vmul.f32 %v812, %v811
    %v814 = vmul.f32 0.5, %v813
    %v815 = vsub.f32 1.5, %v814
    %v816 = vmul.f32 %v811, %v815
    %vm817 = vweird.f32 %v797
    %vm818 = vweird.f32 %v811
    %vm819 = vmor %vm817, %vm818
    %v820 = vsel %vm819, %v811, %v816
    %v821 = vrsqrt.pop %v798
    %v822 = vmul.f32 %v821, %v798
    %v823 = vmul.f32 %v822, %v821
    %v824 = vmul.f32 0.5, %v823
    %v825 = vsub.f32 1.5, %v824
    %v826 = vmul.f32 %v821, %v825
    %vm827 = vweird.f32 %v798
    %vm828 = vweird.f32 %v821
    %vm829 = vmor %vm827, %vm828
    %v830 = vsel %vm829, %v821, %v826
    %v831 = vrsqrt.pop %v799
    %v832 = vmul.f32 %v831, %v799
    %v833 = vmul.f32 %v832, %v831
    %v834 = vmul.f32 0.5, %v833
    %v835 = vsub.f32 1.5, %v834
    %v836 = vmul.f32 %v831, %v835
    %vm837 = vweird.f32 %v799
    %vm838 = vweird.f32 %v831
    %vm839 = vmor %vm837, %vm838
    %v840 = vsel %vm839, %v831, %v836
    %v841 = vrsqrt.pop %v800
    %v842 = vmul.f32 %v841, %v800
    %v843 = vmul.f32 %v842, %v841
    %v844 = vmul.f32 0.5, %v843
    %v845 = vsub.f32 1.5, %v844
    %v846 = vmul.f32 %v841, %v845
    %vm847 = vweird.f32 %v800
    %vm848 = vweird.f32 %v841
    %vm849 = vmor %vm847, %vm848
    %v850 = vsel %vm849, %v841, %v846
    %v851 = vmul.f32 %v766, %v810
    %v852 = vmul.f32 %v767, %v820
    %v853 = vmul.f32 %v768, %v830
    %v854 = vmul.f32 %v769, %v840
    %v855 = vmul.f32 %v770, %v850
    %856 = vset.pattern.permute.xlu0 8
    %857 = vperm.xlu0 %856, %v15
    %v858 = vpop.permute.xlu0 %857
    %860 = vset.pattern.permute.xlu0 8
    %861 = vperm.xlu0 %860, %v16
    %v862 = vpop.permute.xlu0 %861
    %864 = vset.pattern.permute.xlu0 8
    %865 = vperm.xlu0 %864, %v17
    %v866 = vpop.permute.xlu0 %865
    %868 = vset.pattern.permute.xlu0 8
    %869 = vperm.xlu0 %868, %v18
    %v870 = vpop.permute.xlu0 %869
    %872 = vset.pattern.permute.xlu0 8
    %873 = vperm.xlu0 %872, %v19
    %v874 = vpop.permute.xlu0 %873
    %v876 = vmul.f32 %v851, %v858
    %v877 = vmul.f32 %v852, %v862
    %v878 = vmul.f32 %v853, %v866
    %v879 = vmul.f32 %v854, %v870
    %v880 = vmul.f32 %v855, %v874
    %881 = vset.pattern.permute.xlu0 12
    %882 = vperm.xlu0 %881, %v15
    %v883 = vpop.permute.xlu0 %882
    %885 = vset.pattern.permute.xlu0 12
    %886 = vperm.xlu0 %885, %v16
    %v887 = vpop.permute.xlu0 %886
    %889 = vset.pattern.permute.xlu0 12
    %890 = vperm.xlu0 %889, %v17
    %v891 = vpop.permute.xlu0 %890
    %893 = vset.pattern.permute.xlu0 12
    %894 = vperm.xlu0 %893, %v18
    %v895 = vpop.permute.xlu0 %894
    %897 = vset.pattern.permute.xlu0 12
    %898 = vperm.xlu0 %897, %v19
    %v899 = vpop.permute.xlu0 %898
    %v901 = vadd.f32 %v876, %v883
    %v902 = vadd.f32 %v877, %v887
    %v903 = vadd.f32 %v878, %v891
    %v904 = vadd.f32 %v879, %v895
    %v905 = vadd.f32 %v880, %v899
    %v906 = vxor.u32 %v901, 2147483648
    %v907 = vxor.u32 %v902, 2147483648
    %v908 = vxor.u32 %v903, 2147483648
    %v909 = vxor.u32 %v904, 2147483648
    %v910 = vxor.u32 %v905, 2147483648
    %v911 = vmul.f32 %v906, 1.442695
    %v912 = vpow.pop %v911
    %v913 = vmul.f32 %v907, 1.442695
    %v914 = vpow.pop %v913
    %v915 = vmul.f32 %v908, 1.442695
    %v916 = vpow.pop %v915
    %v917 = vmul.f32 %v909, 1.442695
    %v918 = vpow.pop %v917
    %v919 = vmul.f32 %v910, 1.442695
    %v920 = vpow.pop %v919
    %v921 = vadd.f32 %v912, 1.0
    %v922 = vadd.f32 %v914, 1.0
    %v923 = vadd.f32 %v916, 1.0
    %v924 = vadd.f32 %v918, 1.0
    %v925 = vadd.f32 %v920, 1.0
    %v926 = vrcp.pop %v921
    %v927 = vmul.f32 %v921, %v926
    %v928 = vsub.f32 1.0, %v927
    %v929 = vmul.f32 %v926, %v928
    %v930 = vadd.f32 %v926, %v929
    %vm931 = vweird.f32 %v921
    %vm932 = vweird.f32 %v926
    %vm933 = vmor %vm931, %vm932
    %v934 = vsel %vm933, %v926, %v930
    %v935 = vand.u32 2147483647, %v921
    %vm936 = vcmp.eq.f32.partialorder %v935, 8.507059e+37
    %v937 = vand.u32 %v921, 2147483648
    %v938 = vor.u32 1.1754944e-38, %v937
    %v939 = vsel %vm936, %v938, %v934
    %v940 = vmul.f32 1.0, %v939
    %v941 = vrcp.pop %v922
    %v942 = vmul.f32 %v922, %v941
    %v943 = vsub.f32 1.0, %v942
    %v944 = vmul.f32 %v941, %v943
    %v945 = vadd.f32 %v941, %v944
    %vm946 = vweird.f32 %v922
    %vm947 = vweird.f32 %v941
    %vm948 = vmor %vm946, %vm947
    %v949 = vsel %vm948, %v941, %v945
    %v950 = vand.u32 2147483647, %v922
    %vm951 = vcmp.eq.f32.partialorder %v950, 8.507059e+37
    %v952 = vand.u32 %v922, 2147483648
    %v953 = vor.u32 1.1754944e-38, %v952
    %v954 = vsel %vm951, %v953, %v949
    %v955 = vmul.f32 1.0, %v954
    %v956 = vrcp.pop %v923
    %v957 = vmul.f32 %v923, %v956
    %v958 = vsub.f32 1.0, %v957
    %v959 = vmul.f32 %v956, %v958
    %v960 = vadd.f32 %v956, %v959
    %vm961 = vweird.f32 %v923
    %vm962 = vweird.f32 %v956
    %vm963 = vmor %vm961, %vm962
    %v964 = vsel %vm963, %v956, %v960
    %v965 = vand.u32 2147483647, %v923
    %vm966 = vcmp.eq.f32.partialorder %v965, 8.507059e+37
    %v967 = vand.u32 %v923, 2147483648
    %v968 = vor.u32 1.1754944e-38, %v967
    %v969 = vsel %vm966, %v968, %v964
    %v970 = vmul.f32 1.0, %v969
    %v971 = vrcp.pop %v924
    %v972 = vmul.f32 %v924, %v971
    %v973 = vsub.f32 1.0, %v972
    %v974 = vmul.f32 %v971, %v973
    %v975 = vadd.f32 %v971, %v974
    %vm976 = vweird.f32 %v924
    %vm977 = vweird.f32 %v971
    %vm978 = vmor %vm976, %vm977
    %v979 = vsel %vm978, %v971, %v975
    %v980 = vand.u32 2147483647, %v924
    %vm981 = vcmp.eq.f32.partialorder %v980, 8.507059e+37
    %v982 = vand.u32 %v924, 2147483648
    %v983 = vor.u32 1.1754944e-38, %v982
    %v984 = vsel %vm981, %v983, %v979
    %v985 = vmul.f32 1.0, %v984
    %v986 = vrcp.pop %v925
    %v987 = vmul.f32 %v925, %v986
    %v988 = vsub.f32 1.0, %v987
    %v989 = vmul.f32 %v986, %v988
    %v990 = vadd.f32 %v986, %v989
    %vm991 = vweird.f32 %v925
    %vm992 = vweird.f32 %v986
    %vm993 = vmor %vm991, %vm992
    %v994 = vsel %vm993, %v986, %v990
    %v995 = vand.u32 2147483647, %v925
    %vm996 = vcmp.eq.f32.partialorder %v995, 8.507059e+37
    %v997 = vand.u32 %v925, 2147483648
    %v998 = vor.u32 1.1754944e-38, %v997
    %v999 = vsel %vm996, %v998, %v994
    %v1000 = vmul.f32 1.0, %v999
    %v1001 = vmul.f32 %v901, %v940
    %v1002 = vmul.f32 %v902, %v955
    %v1003 = vmul.f32 %v903, %v970
    %v1004 = vmul.f32 %v904, %v985
    %v1005 = vmul.f32 %v905, %v1000
    %v1006 = vld [vmem:[%s1 + $0x70] sm:$0x1f]
    %1007 = vset.pattern.permute.xlu0 4
    %1008 = vperm.xlu0 %1007, %v15
    %v1009 = vpop.permute.xlu0 %1008
    %vm1011 = vcmask 326656
    %v1013 = vsel %vm1011, %v1006, 0
    %1015 = vmatpush.msra.mxu0 0.0
    %1016 = vmatpush.msra.mxu0 0.0
    %1017 = vmatpush.msra.mxu0 0.0
    %1018 = vmatpush.msra.mxu0 0.0
    %1019 = vmatpush.msra.mxu0 0.0
    %1020 = vmatpush.msra.mxu0 0.0
    %1021 = vmatpush.msra.mxu0 0.0
    %1022 = vmatpush.msra.mxu0 0.0
    %1023 = vmatpush.msra.mxu0 0.0
    %1024 = vmatpush.msra.mxu0 0.0
    %1025 = vmatpush.msra.mxu0 0.0
    %1026 = vmatpush.msra.mxu0 %v1005
    %1027 = vmatpush.msra.mxu0 %v1004
    %1028 = vmatpush.msra.mxu0 %v1003
    %1029 = vmatpush.msra.mxu0 %v1002
    %1030 = vmatpush.msra.mxu0 %v1001
    %1031 = vmatmul.f32.gmra.mxu0 %v1013
    %v1032 = vpop.f32.mrf.mxu0
    %v1033 = vadd.f32 %v1009, %v1032
    %1034 = vdwg.mxu0
    %1035 = vst [vmem:[#allocation2] sm:$0x1f] %v1033
    // Predicated region
    $region14: #{tpu_custom_call.1} parent=1 // pred_check
      _
    $region15: #{tpu_custom_call.1} parent=1 // pred_check_branch
      %1037 = sbr.rel (0) target = $region17
    $region16: #{tpu_custom_call.1} parent=1 // pred_region
      %1039 = vsyncadd [#allocation3], 0
      %s1041 = sshll.u32 [#allocation2], 4
      %s1042 = int_to_ptr.vmem [resolvable:$true] %s1041
      %s1043 = sshll.u32 %s3, 4
      %s1044 = int_to_ptr.hbm [resolvable:$true] %s1043
      %1046 = dma.vmem_to_hbm [thread:$0]  %s1042, 128, %s1044, [#allocation3]
    $region17: #{tpu_custom_call.1} parent=1 // pred_fallthru
      _
    // Predicated region
    $region18: #{tpu_custom_call.1} parent=1 // pred_check
      _
    $region19: #{tpu_custom_call.1} parent=1 // pred_check_branch
      %1048 = sbr.rel (0) target = $region21
    $region20: #{tpu_custom_call.1} parent=1 // pred_region
      %1050 = dma.done [#allocation3], 128
    $region21: #{tpu_custom_call.1} parent=1 // pred_fallthru
      _
    %1051 = vsyncpa [#allocation3], 1

</llo_original>
